<compile_context>
chip_gen: v5e
topology: v5e:2x2
jax: 0.10.0
libtpu: 0.0.40
codegen_flags: <defaults>
</compile_context>

<pallas_src>
import functools

import jax
import jax.numpy as jnp
import numpy as np
from jax.experimental import pallas as pl
from jax.experimental.pallas import tpu as pltpu

LN_EPS = 1e-5
NEG_SLOPE = 0.02


def _probe_pipeline_mode():
    """Does this JAX build accept pipeline_mode=pl.Buffered(k) on BlockSpec?"""
    try:
        pl.BlockSpec((8, 128), lambda i: (0, 0), pipeline_mode=pl.Buffered(1))
        return True
    except Exception:
        return False


_HAS_PIPELINE_MODE = _probe_pipeline_mode()


def _leaky_relu(v):
    return jnp.where(v >= 0, v, NEG_SLOPE * v)


def _layer_norm_padded(v, gamma, beta, true_width):
    """LayerNorm over a lane-padded feature axis.

    Padded lanes of `v` are exactly zero, so sums over the padded width equal
    sums over the true width; dividing by `true_width` gives the correct
    statistics.  Padded gamma/beta are zero, so padded output lanes stay 0.
    """
    inv_n = jnp.float32(1.0 / float(true_width))
    mu = jnp.sum(v, axis=-1, keepdims=True) * inv_n
    ex2 = jnp.sum(v * v, axis=-1, keepdims=True) * inv_n
    var = jnp.maximum(ex2 - mu * mu, 0.0)          # one-pass variance
    return (v - mu) * jax.lax.rsqrt(var + LN_EPS) * gamma + beta


def conditional_layer_kernel(
    x_ref, temb_ref,
    in_norm_w_ref, in_norm_b_ref,
    in_fc_w_ref,
    proj_w_ref, fused_b_ref,
    out_norm_w_ref, out_norm_b_ref,
    out_fc_w_ref, out_fc_b_ref,
    o_ref,
    *, true_in_dim, true_out_dim, mxu_dtype,
):
    x = x_ref[...].astype(jnp.float32)

    # in_norm -> act (f32 VPU/EUP math)
    h = _leaky_relu(_layer_norm_padded(
        x, in_norm_w_ref[...].astype(jnp.float32),
        in_norm_b_ref[...].astype(jnp.float32), true_in_dim))
    t = _leaky_relu(temb_ref[...].astype(jnp.float32))

    # in_fc + proj : bf16 (or f32) MXU operands, f32 accumulation.
    out = jnp.dot(h.astype(mxu_dtype), in_fc_w_ref[...],
                  preferred_element_type=jnp.float32)
    out = out + jnp.dot(t.astype(mxu_dtype), proj_w_ref[...],
                        preferred_element_type=jnp.float32)
    out = out + fused_b_ref[...].astype(jnp.float32)   # b_in + b_proj (pre-summed)

    # out_norm -> act -> (dropout = Identity, drop_rate=0) -> out_fc
    h2 = _leaky_relu(_layer_norm_padded(
        out, out_norm_w_ref[...].astype(jnp.float32),
        out_norm_b_ref[...].astype(jnp.float32), true_out_dim))
    y = jnp.dot(h2.astype(mxu_dtype), out_fc_w_ref[...],
                preferred_element_type=jnp.float32)
    y = y + out_fc_b_ref[...].astype(jnp.float32)

    o_ref[...] = y.astype(o_ref.dtype)


def _round_up(n, m):
    return (n + m - 1) // m * m


def _pad2(a, rows, cols):
    r, c = a.shape
    return jnp.pad(a, ((0, rows - r), (0, cols - c)))


def conditional_layer(x, t_emb, params, *, tile_b=256, compute_dtype=jnp.bfloat16):
    """Pallas TPU forward of ConditionalLayer.

    tile_b:        batch tile (>=128 recommended; 256 saturates v6e/v7x MXU M).
    compute_dtype: dtype of the MXU operands (weights + cast activations).
                   Accumulation and all LayerNorm/activation math stay f32.
    """
    B, in_dim = x.shape
    temb_dim = t_emb.shape[1]
    out_dim = params["in_fc_w"].shape[1]

    # Lane-dense feature widths (multiples of 128) and padded batch.
    in_p = _round_up(in_dim, 128)
    temb_p = _round_up(temb_dim, 128)
    out_p = _round_up(out_dim, 128)

    tile_b = min(tile_b, _round_up(B, 8))
    Bp = _round_up(B, tile_b)
    grid = (Bp // tile_b,)

    f32 = jnp.float32
    x_p = _pad2(x, Bp, in_p)
    t_p = _pad2(t_emb, Bp, temb_p)

    in_fc_w = _pad2(params["in_fc_w"].astype(f32), in_p, out_p).astype(compute_dtype)
    proj_w = _pad2(params["proj_w"].astype(f32), temb_p, out_p).astype(compute_dtype)
    out_fc_w = _pad2(params["out_fc_w"].astype(f32), out_p, out_p).astype(compute_dtype)

    fused_b = _pad2((params["in_fc_b"] + params["proj_b"]).astype(f32), 1, out_p)
    out_fc_b = _pad2(params["out_fc_b"].astype(f32), 1, out_p)
    in_norm_w = _pad2(params["in_norm_w"].astype(f32), 1, in_p)
    in_norm_b = _pad2(params["in_norm_b"].astype(f32), 1, in_p)
    out_norm_w = _pad2(params["out_norm_w"].astype(f32), 1, out_p)
    out_norm_b = _pad2(params["out_norm_b"].astype(f32), 1, out_p)

    args = (x_p, t_p, in_norm_w, in_norm_b, in_fc_w, proj_w, fused_b,
            out_norm_w, out_norm_b, out_fc_w, out_fc_b)

    def act_spec(feat):
        return pl.BlockSpec((tile_b, feat), lambda i: (i, 0))

    def const_spec(shape):
        # Grid-invariant operand: single-buffer it when supported (halves its
        # resident VMEM); the index_map being constant means it is only DMA'd
        # once either way.
        if _HAS_PIPELINE_MODE:
            return pl.BlockSpec(shape, lambda i: (0,) * len(shape),
                                pipeline_mode=pl.Buffered(1))
        return pl.BlockSpec(shape, lambda i: (0,) * len(shape))

    in_specs = [
        act_spec(in_p),                  # x
        act_spec(temb_p),                # t_emb
        const_spec((1, in_p)),           # in_norm weight
        const_spec((1, in_p)),           # in_norm bias
        const_spec((in_p, out_p)),       # in_fc W
        const_spec((temb_p, out_p)),     # proj W
        const_spec((1, out_p)),          # fused bias (b_in + b_proj)
        const_spec((1, out_p)),          # out_norm weight
        const_spec((1, out_p)),          # out_norm bias
        const_spec((out_p, out_p)),      # out_fc W
        const_spec((1, out_p)),          # out_fc bias
    ]
    out_spec = pl.BlockSpec((tile_b, out_p), lambda i: (i, 0))

    weight_bytes = sum(int(w.size) * w.dtype.itemsize
                       for w in (in_fc_w, proj_w, out_fc_w))
    small_bytes = sum(int(b.size) * 4 for b in (fused_b, out_fc_b, in_norm_w,
                                                in_norm_b, out_norm_w, out_norm_b))
    io_bytes = (int(x_p.size) * x_p.dtype.itemsize
                + int(t_p.size) * t_p.dtype.itemsize
                + Bp * out_p * jnp.dtype(x.dtype).itemsize)
    cost = pl.CostEstimate(
        flops=int(2 * Bp * (in_p + temb_p + out_p) * out_p),
        transcendentals=int(2 * Bp),                       # two rsqrt per row
        bytes_accessed=int(weight_bytes + small_bytes + io_bytes),
    )

    kernel = functools.partial(
        conditional_layer_kernel,
        true_in_dim=in_dim, true_out_dim=out_dim, mxu_dtype=compute_dtype)

    y = pl.pallas_call(
        kernel,
        out_shape=jax.ShapeDtypeStruct((Bp, out_p), x.dtype),
        grid_spec=pltpu.PrefetchScalarGridSpec(
            num_scalar_prefetch=0,
            grid=grid,
            in_specs=in_specs,
            out_specs=out_spec,
        ),
        compiler_params=pltpu.CompilerParams(
            dimension_semantics=("parallel",),
            vmem_limit_bytes=48 * 1024 * 1024,   # fits v7x's 64 MiB physical VMEM
        ),
        cost_estimate=cost,
    )(*args)

    return y[:B, :out_dim]


def conditional_layer_ref(x, t_emb, params):
    """Pure-JAX reference (mirrors the PyTorch forward, f32 throughout)."""
    def ln(v, gamma, beta):
        mu = jnp.mean(v, axis=-1, keepdims=True)
        var = jnp.mean((v - mu) ** 2, axis=-1, keepdims=True)
        return (v - mu) * jax.lax.rsqrt(var + LN_EPS) * gamma + beta

    x = x.astype(jnp.float32)
    h = _leaky_relu(ln(x, params["in_norm_w"], params["in_norm_b"]))
    out = h @ params["in_fc_w"] + params["in_fc_b"]
    t = _leaky_relu(t_emb.astype(jnp.float32))
    out = out + t @ params["proj_w"] + params["proj_b"]
    h2 = _leaky_relu(ln(out, params["out_norm_w"], params["out_norm_b"]))
    return h2 @ params["out_fc_w"] + params["out_fc_b"]


def init_params(key, in_dim, out_dim, temb_dim):
    ks = jax.random.split(key, 3)

    def lin(k, fan_in, fan_out):
        bound = 1.0 / np.sqrt(fan_in)
        kw, kb = jax.random.split(k)
        w = jax.random.uniform(kw, (fan_in, fan_out), jnp.float32, -bound, bound)
        b = jax.random.uniform(kb, (1, fan_out), jnp.float32, -bound, bound)
        return w, b

    in_fc_w, in_fc_b = lin(ks[0], in_dim, out_dim)
    proj_w, proj_b = lin(ks[1], temb_dim, out_dim)
    out_fc_w, out_fc_b = lin(ks[2], out_dim, out_dim)
    return {
        # LayerNorm params init to (1, 0) like nn.LayerNorm
        "in_norm_w": jnp.ones((1, in_dim), jnp.float32),
        "in_norm_b": jnp.zeros((1, in_dim), jnp.float32),
        "out_norm_w": jnp.ones((1, out_dim), jnp.float32),
        "out_norm_b": jnp.zeros((1, out_dim), jnp.float32),
        "in_fc_w": in_fc_w, "in_fc_b": in_fc_b,
        "proj_w": proj_w, "proj_b": proj_b,
        "out_fc_w": out_fc_w, "out_fc_b": out_fc_b,
    }


if __name__ == "__main__":
    # Small, deliberately non-128-multiple shapes to exercise the padding path.
    B, in_dim, out_dim, temb_dim = 64, 32, 48, 16

    key = jax.random.PRNGKey(0)
    kx, kt, kp = jax.random.split(key, 3)
    x = jax.random.normal(kx, (B, in_dim), jnp.float32)
    t_emb = jax.random.normal(kt, (B, temb_dim), jnp.float32)
    params = init_params(kp, in_dim, out_dim, temb_dim)

    y_ref = jax.block_until_ready(conditional_layer_ref(x, t_emb, params))

    # f32-operand path: tight check against the pure-JAX reference.
    y_f32 = jax.block_until_ready(
        conditional_layer(x, t_emb, params, compute_dtype=jnp.float32))
    np.testing.assert_allclose(np.asarray(y_f32), np.asarray(y_ref),
                               rtol=1e-4, atol=1e-4)

    # Default bf16-MXU-operand path (perf config): looser tolerance.
    y_bf16 = jax.block_until_ready(conditional_layer(x, t_emb, params))
    np.testing.assert_allclose(np.asarray(y_bf16), np.asarray(y_ref),
                               rtol=5e-2, atol=1e-1)

    print("KERNEL_OK")
</pallas_src>

<mosaic_0001>
module attributes {stable_mosaic.version = 11 : i64} {
  func.func @conditional_layer_kernel(%arg0: i32, %arg1: memref<64x128xf32, #tpu.memory_space<vmem>>, %arg2: memref<64x128xf32, #tpu.memory_space<vmem>>, %arg3: memref<1x128xf32, #tpu.memory_space<vmem>>, %arg4: memref<1x128xf32, #tpu.memory_space<vmem>>, %arg5: memref<128x128xf32, #tpu.memory_space<vmem>>, %arg6: memref<128x128xf32, #tpu.memory_space<vmem>>, %arg7: memref<1x128xf32, #tpu.memory_space<vmem>>, %arg8: memref<1x128xf32, #tpu.memory_space<vmem>>, %arg9: memref<1x128xf32, #tpu.memory_space<vmem>>, %arg10: memref<128x128xf32, #tpu.memory_space<vmem>>, %arg11: memref<1x128xf32, #tpu.memory_space<vmem>>, %arg12: memref<64x128xf32, #tpu.memory_space<vmem>>) attributes {dimension_semantics = [#tpu.dimension_semantics<parallel>], iteration_bounds = array<i64: 1>, scalar_prefetch = 0 : i64, scratch_operands = 0 : i64, tpu.core_type = #tpu.core_type<tc>, window_params = [{transform_indices = @transform_0, window_bounds = array<i64: 64, 128>}, {transform_indices = @transform_1, window_bounds = array<i64: 64, 128>}, {pipeline_mode = #tpu.pipeline_mode<synchronous>, transform_indices = @transform_2, window_bounds = array<i64: 1, 128>}, {pipeline_mode = #tpu.pipeline_mode<synchronous>, transform_indices = @transform_3, window_bounds = array<i64: 1, 128>}, {pipeline_mode = #tpu.pipeline_mode<synchronous>, transform_indices = @transform_4, window_bounds = array<i64: 128, 128>}, {pipeline_mode = #tpu.pipeline_mode<synchronous>, transform_indices = @transform_5, window_bounds = array<i64: 128, 128>}, {pipeline_mode = #tpu.pipeline_mode<synchronous>, transform_indices = @transform_6, window_bounds = array<i64: 1, 128>}, {pipeline_mode = #tpu.pipeline_mode<synchronous>, transform_indices = @transform_7, window_bounds = array<i64: 1, 128>}, {pipeline_mode = #tpu.pipeline_mode<synchronous>, transform_indices = @transform_8, window_bounds = array<i64: 1, 128>}, {pipeline_mode = #tpu.pipeline_mode<synchronous>, transform_indices = @transform_9, window_bounds = array<i64: 128, 128>}, {pipeline_mode = #tpu.pipeline_mode<synchronous>, transform_indices = @transform_10, window_bounds = array<i64: 1, 128>}, {transform_indices = @transform_11, window_bounds = array<i64: 64, 128>}]} {
    %c0 = arith.constant 0 : index
    %c0_0 = arith.constant 0 : index
    %0 = vector.load %arg1[%c0, %c0_0] : memref<64x128xf32, #tpu.memory_space<vmem>>, vector<64x128xf32>
    %c0_1 = arith.constant 0 : index
    %c0_2 = arith.constant 0 : index
    %1 = vector.load %arg3[%c0_1, %c0_2] : memref<1x128xf32, #tpu.memory_space<vmem>>, vector<1x128xf32>
    %c0_3 = arith.constant 0 : index
    %c0_4 = arith.constant 0 : index
    %2 = vector.load %arg4[%c0_3, %c0_4] : memref<1x128xf32, #tpu.memory_space<vmem>>, vector<1x128xf32>
    %cst = arith.constant dense<0.000000e+00> : vector<64xf32>
    %3 = vector.multi_reduction <add>, %0, %cst [1] : vector<64x128xf32> to vector<64xf32>
    %4 = vector.shape_cast %3 : vector<64xf32> to vector<64x1xf32>
    %cst_5 = arith.constant 3.125000e-02 : f32
    %5 = vector.broadcast %cst_5 : f32 to vector<64x1xf32>
    %6 = arith.mulf %4, %5 : vector<64x1xf32>
    %7 = arith.mulf %0, %0 : vector<64x128xf32>
    %cst_6 = arith.constant dense<0.000000e+00> : vector<64xf32>
    %8 = vector.multi_reduction <add>, %7, %cst_6 [1] : vector<64x128xf32> to vector<64xf32>
    %9 = vector.shape_cast %8 : vector<64xf32> to vector<64x1xf32>
    %cst_7 = arith.constant 3.125000e-02 : f32
    %10 = vector.broadcast %cst_7 : f32 to vector<64x1xf32>
    %11 = arith.mulf %9, %10 : vector<64x1xf32>
    %12 = arith.mulf %6, %6 : vector<64x1xf32>
    %13 = arith.subf %11, %12 : vector<64x1xf32>
    %cst_8 = arith.constant 0.000000e+00 : f32
    %14 = vector.broadcast %cst_8 : f32 to vector<64x1xf32>
    %15 = arith.maximumf %13, %14 : vector<64x1xf32>
    %16 = vector.broadcast %6 : vector<64x1xf32> to vector<64x128xf32>
    %17 = arith.subf %0, %16 : vector<64x128xf32>
    %cst_9 = arith.constant 9.99999974E-6 : f32
    %18 = vector.broadcast %cst_9 : f32 to vector<64x1xf32>
    %19 = arith.addf %15, %18 : vector<64x1xf32>
    %20 = math.rsqrt %19 : vector<64x1xf32>
    %21 = vector.broadcast %20 : vector<64x1xf32> to vector<64x128xf32>
    %22 = arith.mulf %17, %21 : vector<64x128xf32>
    %23 = vector.broadcast %1 : vector<1x128xf32> to vector<64x128xf32>
    %24 = arith.mulf %22, %23 : vector<64x128xf32>
    %25 = vector.broadcast %2 : vector<1x128xf32> to vector<64x128xf32>
    %26 = arith.addf %24, %25 : vector<64x128xf32>
    %cst_10 = arith.constant 0.000000e+00 : f32
    %27 = vector.broadcast %cst_10 : f32 to vector<64x128xf32>
    %28 = arith.cmpf oge, %26, %27 : vector<64x128xf32>
    %cst_11 = arith.constant 2.000000e-02 : f32
    %29 = vector.broadcast %cst_11 : f32 to vector<64x128xf32>
    %30 = arith.mulf %29, %26 : vector<64x128xf32>
    %31 = arith.select %28, %26, %30 : vector<64x128xi1>, vector<64x128xf32>
    %c0_12 = arith.constant 0 : index
    %c0_13 = arith.constant 0 : index
    %32 = vector.load %arg2[%c0_12, %c0_13] : memref<64x128xf32, #tpu.memory_space<vmem>>, vector<64x128xf32>
    %cst_14 = arith.constant 0.000000e+00 : f32
    %33 = vector.broadcast %cst_14 : f32 to vector<64x128xf32>
    %34 = arith.cmpf oge, %32, %33 : vector<64x128xf32>
    %cst_15 = arith.constant 2.000000e-02 : f32
    %35 = vector.broadcast %cst_15 : f32 to vector<64x128xf32>
    %36 = arith.mulf %35, %32 : vector<64x128xf32>
    %37 = arith.select %34, %32, %36 : vector<64x128xi1>, vector<64x128xf32>
    %c0_16 = arith.constant 0 : index
    %c0_17 = arith.constant 0 : index
    %38 = vector.load %arg5[%c0_16, %c0_17] : memref<128x128xf32, #tpu.memory_space<vmem>>, vector<128x128xf32>
    %cst_18 = arith.constant dense<0.000000e+00> : vector<64x128xf32>
    %39 = tpu.matmul %31, %38, %cst_18 {dimension_numbers = #tpu.dot_dimension_numbers<[1], [0], [0], [1], [0, 0, 1, 1], [], []>} : vector<64x128xf32>, vector<128x128xf32>, vector<64x128xf32> -> vector<64x128xf32>
    %c0_19 = arith.constant 0 : index
    %c0_20 = arith.constant 0 : index
    %40 = vector.load %arg6[%c0_19, %c0_20] : memref<128x128xf32, #tpu.memory_space<vmem>>, vector<128x128xf32>
    %cst_21 = arith.constant dense<0.000000e+00> : vector<64x128xf32>
    %41 = tpu.matmul %37, %40, %cst_21 {dimension_numbers = #tpu.dot_dimension_numbers<[1], [0], [0], [1], [0, 0, 1, 1], [], []>} : vector<64x128xf32>, vector<128x128xf32>, vector<64x128xf32> -> vector<64x128xf32>
    %42 = arith.addf %39, %41 : vector<64x128xf32>
    %c0_22 = arith.constant 0 : index
    %c0_23 = arith.constant 0 : index
    %43 = vector.load %arg7[%c0_22, %c0_23] : memref<1x128xf32, #tpu.memory_space<vmem>>, vector<1x128xf32>
    %44 = vector.broadcast %43 : vector<1x128xf32> to vector<64x128xf32>
    %45 = arith.addf %42, %44 : vector<64x128xf32>
    %c0_24 = arith.constant 0 : index
    %c0_25 = arith.constant 0 : index
    %46 = vector.load %arg8[%c0_24, %c0_25] : memref<1x128xf32, #tpu.memory_space<vmem>>, vector<1x128xf32>
    %c0_26 = arith.constant 0 : index
    %c0_27 = arith.constant 0 : index
    %47 = vector.load %arg9[%c0_26, %c0_27] : memref<1x128xf32, #tpu.memory_space<vmem>>, vector<1x128xf32>
    %cst_28 = arith.constant dense<0.000000e+00> : vector<64xf32>
    %48 = vector.multi_reduction <add>, %45, %cst_28 [1] : vector<64x128xf32> to vector<64xf32>
    %49 = vector.shape_cast %48 : vector<64xf32> to vector<64x1xf32>
    %cst_29 = arith.constant 0.020833334 : f32
    %50 = vector.broadcast %cst_29 : f32 to vector<64x1xf32>
    %51 = arith.mulf %49, %50 : vector<64x1xf32>
    %52 = arith.mulf %45, %45 : vector<64x128xf32>
    %cst_30 = arith.constant dense<0.000000e+00> : vector<64xf32>
    %53 = vector.multi_reduction <add>, %52, %cst_30 [1] : vector<64x128xf32> to vector<64xf32>
    %54 = vector.shape_cast %53 : vector<64xf32> to vector<64x1xf32>
    %cst_31 = arith.constant 0.020833334 : f32
    %55 = vector.broadcast %cst_31 : f32 to vector<64x1xf32>
    %56 = arith.mulf %54, %55 : vector<64x1xf32>
    %57 = arith.mulf %51, %51 : vector<64x1xf32>
    %58 = arith.subf %56, %57 : vector<64x1xf32>
    %cst_32 = arith.constant 0.000000e+00 : f32
    %59 = vector.broadcast %cst_32 : f32 to vector<64x1xf32>
    %60 = arith.maximumf %58, %59 : vector<64x1xf32>
    %61 = vector.broadcast %51 : vector<64x1xf32> to vector<64x128xf32>
    %62 = arith.subf %45, %61 : vector<64x128xf32>
    %cst_33 = arith.constant 9.99999974E-6 : f32
    %63 = vector.broadcast %cst_33 : f32 to vector<64x1xf32>
    %64 = arith.addf %60, %63 : vector<64x1xf32>
    %65 = math.rsqrt %64 : vector<64x1xf32>
    %66 = vector.broadcast %65 : vector<64x1xf32> to vector<64x128xf32>
    %67 = arith.mulf %62, %66 : vector<64x128xf32>
    %68 = vector.broadcast %46 : vector<1x128xf32> to vector<64x128xf32>
    %69 = arith.mulf %67, %68 : vector<64x128xf32>
    %70 = vector.broadcast %47 : vector<1x128xf32> to vector<64x128xf32>
    %71 = arith.addf %69, %70 : vector<64x128xf32>
    %cst_34 = arith.constant 0.000000e+00 : f32
    %72 = vector.broadcast %cst_34 : f32 to vector<64x128xf32>
    %73 = arith.cmpf oge, %71, %72 : vector<64x128xf32>
    %cst_35 = arith.constant 2.000000e-02 : f32
    %74 = vector.broadcast %cst_35 : f32 to vector<64x128xf32>
    %75 = arith.mulf %74, %71 : vector<64x128xf32>
    %76 = arith.select %73, %71, %75 : vector<64x128xi1>, vector<64x128xf32>
    %c0_36 = arith.constant 0 : index
    %c0_37 = arith.constant 0 : index
    %77 = vector.load %arg10[%c0_36, %c0_37] : memref<128x128xf32, #tpu.memory_space<vmem>>, vector<128x128xf32>
    %cst_38 = arith.constant dense<0.000000e+00> : vector<64x128xf32>
    %78 = tpu.matmul %76, %77, %cst_38 {dimension_numbers = #tpu.dot_dimension_numbers<[1], [0], [0], [1], [0, 0, 1, 1], [], []>} : vector<64x128xf32>, vector<128x128xf32>, vector<64x128xf32> -> vector<64x128xf32>
    %c0_39 = arith.constant 0 : index
    %c0_40 = arith.constant 0 : index
    %79 = vector.load %arg11[%c0_39, %c0_40] : memref<1x128xf32, #tpu.memory_space<vmem>>, vector<1x128xf32>
    %80 = vector.broadcast %79 : vector<1x128xf32> to vector<64x128xf32>
    %81 = arith.addf %78, %80 : vector<64x128xf32>
    %c0_41 = arith.constant 0 : index
    %c0_42 = arith.constant 0 : index
    %82 = vector.load %arg12[%c0_41, %c0_42] : memref<64x128xf32, #tpu.memory_space<vmem>>, vector<64x128xf32>
    tpu.vector_store %arg12[%c0_41, %c0_42], %81 {strides = array<i32>} : memref<64x128xf32, #tpu.memory_space<vmem>>, vector<64x128xf32>,
    return
  }
  func.func @transform_0(%arg0: i32) -> (i32, i32) {
    %c0_i32 = arith.constant 0 : i32
    %c0_i32_0 = arith.constant 0 : i32
    return %arg0, %c0_i32 : i32, i32
  }
  func.func @transform_1(%arg0: i32) -> (i32, i32) {
    %c0_i32 = arith.constant 0 : i32
    %c0_i32_0 = arith.constant 0 : i32
    return %arg0, %c0_i32 : i32, i32
  }
  func.func @transform_2(%arg0: i32) -> (i32, i32) {
    %c0_i32 = arith.constant 0 : i32
    %c0_i32_0 = arith.constant 0 : i32
    %c0_i32_1 = arith.constant 0 : i32
    return %c0_i32, %c0_i32_0 : i32, i32
  }
  func.func @transform_3(%arg0: i32) -> (i32, i32) {
    %c0_i32 = arith.constant 0 : i32
    %c0_i32_0 = arith.constant 0 : i32
    %c0_i32_1 = arith.constant 0 : i32
    return %c0_i32, %c0_i32_0 : i32, i32
  }
  func.func @transform_4(%arg0: i32) -> (i32, i32) {
    %c0_i32 = arith.constant 0 : i32
    %c0_i32_0 = arith.constant 0 : i32
    %c0_i32_1 = arith.constant 0 : i32
    return %c0_i32, %c0_i32_0 : i32, i32
  }
  func.func @transform_5(%arg0: i32) -> (i32, i32) {
    %c0_i32 = arith.constant 0 : i32
    %c0_i32_0 = arith.constant 0 : i32
    %c0_i32_1 = arith.constant 0 : i32
    return %c0_i32, %c0_i32_0 : i32, i32
  }
  func.func @transform_6(%arg0: i32) -> (i32, i32) {
    %c0_i32 = arith.constant 0 : i32
    %c0_i32_0 = arith.constant 0 : i32
    %c0_i32_1 = arith.constant 0 : i32
    return %c0_i32, %c0_i32_0 : i32, i32
  }
  func.func @transform_7(%arg0: i32) -> (i32, i32) {
    %c0_i32 = arith.constant 0 : i32
    %c0_i32_0 = arith.constant 0 : i32
    %c0_i32_1 = arith.constant 0 : i32
    return %c0_i32, %c0_i32_0 : i32, i32
  }
  func.func @transform_8(%arg0: i32) -> (i32, i32) {
    %c0_i32 = arith.constant 0 : i32
    %c0_i32_0 = arith.constant 0 : i32
    %c0_i32_1 = arith.constant 0 : i32
    return %c0_i32, %c0_i32_0 : i32, i32
  }
  func.func @transform_9(%arg0: i32) -> (i32, i32) {
    %c0_i32 = arith.constant 0 : i32
    %c0_i32_0 = arith.constant 0 : i32
    %c0_i32_1 = arith.constant 0 : i32
    return %c0_i32, %c0_i32_0 : i32, i32
  }
  func.func @transform_10(%arg0: i32) -> (i32, i32) {
    %c0_i32 = arith.constant 0 : i32
    %c0_i32_0 = arith.constant 0 : i32
    %c0_i32_1 = arith.constant 0 : i32
    return %c0_i32, %c0_i32_0 : i32, i32
  }
  func.func @transform_11(%arg0: i32) -> (i32, i32) {
    %c0_i32 = arith.constant 0 : i32
    %c0_i32_0 = arith.constant 0 : i32
    return %arg0, %c0_i32 : i32, i32
  }
}

</mosaic_0001>

<llo_original>
// kernel: tpu_custom_call.1
$region0: #{tpu_custom_call.1}
  #allocation0 [shape = 'u32[]', space=smem, size = 0x4, offset = 0x4, fixed_abs, tag = 'smem constant byte address 0x4 - core index']
  #allocation1 [shape = 'u32[72,128]{1,0:T(1,128)}', space=vmem, size = 0x9000, scoped, tag = 'internal scratch']
  %s0 = inlined_call_operand.hbm [shape: f32[64,128], index: 0, kind: input, shape index: {}]
  %s1 = inlined_call_operand.hbm [shape: f32[64,128], index: 1, kind: input, shape index: {}]
  %s2 = inlined_call_operand.vmem [shape: f32[1,128], index: 2, kind: input, shape index: {}]
  %s3 = inlined_call_operand.vmem [shape: f32[1,128], index: 3, kind: input, shape index: {}]
  %s4 = inlined_call_operand.hbm [shape: f32[128,128], index: 4, kind: input, shape index: {}]
  %s5 = inlined_call_operand.hbm [shape: f32[128,128], index: 5, kind: input, shape index: {}]
  %s6 = inlined_call_operand.vmem [shape: f32[1,128], index: 6, kind: input, shape index: {}]
  %s7 = inlined_call_operand.vmem [shape: f32[1,128], index: 7, kind: input, shape index: {}]
  %s8 = inlined_call_operand.vmem [shape: f32[1,128], index: 8, kind: input, shape index: {}]
  %s9 = inlined_call_operand.hbm [shape: f32[128,128], index: 9, kind: input, shape index: {}]
  %s10 = inlined_call_operand.vmem [shape: f32[1,128], index: 10, kind: input, shape index: {}]
  %s11 = inlined_call_operand.hbm [shape: f32[64,128], index: 11, kind: output, shape index: {}]
  %s12 = sld [smem:[#allocation0]]
  $region74: #{tpu_custom_call.1} parent=0
    _
  %s14 = ssub.s32 1, %s12
  %s15 = scalar_select 0, %s14, %s12
  $region1: #{tpu_custom_call.1} parent=0
    #allocation2 [shape = 'u8[32768]{0}', space=vmem, size = 0x8000, scoped, tag = 'input window, operand 0, single buffered']
    #allocation3 [shape = 's32[1]{0}', space=sflag, size = 0x4, scoped, tag = 'scoped memory for tpu_custom_call.1']
    #allocation4 [shape = 's32[1]{0}', space=sflag, size = 0x4, scoped, tag = 'scoped memory for tpu_custom_call.1']
    #allocation5 [shape = 'u8[32768]{0}', space=vmem, size = 0x8000, scoped, tag = 'input window, operand 1, single buffered']
    #allocation6 [shape = 's32[1]{0}', space=sflag, size = 0x4, scoped, tag = 'scoped memory for tpu_custom_call.1']
    #allocation7 [shape = 'u8[65536]{0}', space=vmem, size = 0x10000, scoped, tag = 'input window, operand 4, single buffered']
    #allocation8 [shape = 'u8[65536]{0}', space=vmem, size = 0x10000, scoped, tag = 'input window, operand 5, single buffered']
    #allocation9 [shape = 's32[1]{0}', space=sflag, size = 0x4, scoped, tag = 'scoped memory for tpu_custom_call.1']
    #allocation10 [shape = 'u8[65536]{0}', space=vmem, size = 0x10000, scoped, tag = 'input window, operand 9, single buffered']
    #allocation11 [shape = 'u8[32768]{0}', space=vmem, size = 0x8000, scoped, tag = 'output window, operand 0, single buffered']
    %16 = vsyncpa [#allocation3], 0
    %17 = vsyncpa [#allocation6], 0
    %18 = vsyncpa [#allocation9], 0
    %19 = vsyncpa [#allocation4], 0
    // Predicated region
    $region2: #{tpu_custom_call.1} parent=1 // pred_check
      _
    $region3: #{tpu_custom_call.1} parent=1 // pred_check_branch
      %21 = sbr.rel (0) target = $region5
    $region4: #{tpu_custom_call.1} parent=1 // pred_region
      %23 = vsyncadd [#allocation3], 0
      %s24 = sshll.u32 %s0, 4
      %s25 = int_to_ptr.hbm [resolvable:$true] %s24
      %s26 = sshll.u32 [#allocation2], 4
      %s27 = int_to_ptr.vmem [resolvable:$true] %s26
      %32 = dma.hbm_to_vmem [thread:$0]  %s25, 1024, %s27, [#allocation3], 128, 128, 8
    $region5: #{tpu_custom_call.1} parent=1 // pred_fallthru
      _
    // Predicated region
    $region6: #{tpu_custom_call.1} parent=1 // pred_check
      _
    $region7: #{tpu_custom_call.1} parent=1 // pred_check_branch
      %34 = sbr.rel (0) target = $region9
    $region8: #{tpu_custom_call.1} parent=1 // pred_region
      %36 = vsyncadd [#allocation6], 0
      %s37 = sshll.u32 %s1, 4
      %s38 = int_to_ptr.hbm [resolvable:$true] %s37
      %s39 = sshll.u32 [#allocation5], 4
      %s40 = int_to_ptr.vmem [resolvable:$true] %s39
      %45 = dma.hbm_to_vmem [thread:$0]  %s38, 1024, %s40, [#allocation6], 128, 128, 8
    $region9: #{tpu_custom_call.1} parent=1 // pred_fallthru
      _
    // Predicated region
    $region10: #{tpu_custom_call.1} parent=1 // pred_check
      _
    $region11: #{tpu_custom_call.1} parent=1 // pred_check_branch
      %47 = sbr.rel (0) target = $region13
    $region12: #{tpu_custom_call.1} parent=1 // pred_region
      _
    $region13: #{tpu_custom_call.1} parent=1 // pred_fallthru
      _
    // Predicated region
    $region14: #{tpu_custom_call.1} parent=1 // pred_check
      _
    $region15: #{tpu_custom_call.1} parent=1 // pred_check_branch
      %49 = sbr.rel (0) target = $region17
    $region16: #{tpu_custom_call.1} parent=1 // pred_region
      _
    $region17: #{tpu_custom_call.1} parent=1 // pred_fallthru
      _
    // Predicated region
    $region18: #{tpu_custom_call.1} parent=1 // pred_check
      _
    $region19: #{tpu_custom_call.1} parent=1 // pred_check_branch
      %51 = sbr.rel (0) target = $region21
    $region20: #{tpu_custom_call.1} parent=1 // pred_region
      %53 = vsyncadd [#allocation6], 0
      %s54 = sshll.u32 %s4, 4
      %s55 = int_to_ptr.hbm [resolvable:$true] %s54
      %s56 = sshll.u32 [#allocation7], 4
      %s57 = int_to_ptr.vmem [resolvable:$true] %s56
      %62 = dma.hbm_to_vmem [thread:$0]  %s55, 2048, %s57, [#allocation6], 128, 128, 8
    $region21: #{tpu_custom_call.1} parent=1 // pred_fallthru
      _
    // Predicated region
    $region22: #{tpu_custom_call.1} parent=1 // pred_check
      _
    $region23: #{tpu_custom_call.1} parent=1 // pred_check_branch
      %64 = sbr.rel (0) target = $region25
    $region24: #{tpu_custom_call.1} parent=1 // pred_region
      %66 = vsyncadd [#allocation9], 0
      %s67 = sshll.u32 %s5, 4
      %s68 = int_to_ptr.hbm [resolvable:$true] %s67
      %s69 = sshll.u32 [#allocation8], 4
      %s70 = int_to_ptr.vmem [resolvable:$true] %s69
      %75 = dma.hbm_to_vmem [thread:$0]  %s68, 2048, %s70, [#allocation9], 128, 128, 8
    $region25: #{tpu_custom_call.1} parent=1 // pred_fallthru
      _
    // Predicated region
    $region26: #{tpu_custom_call.1} parent=1 // pred_check
      _
    $region27: #{tpu_custom_call.1} parent=1 // pred_check_branch
      %77 = sbr.rel (0) target = $region29
    $region28: #{tpu_custom_call.1} parent=1 // pred_region
      _
    $region29: #{tpu_custom_call.1} parent=1 // pred_fallthru
      _
    // Predicated region
    $region30: #{tpu_custom_call.1} parent=1 // pred_check
      _
    $region31: #{tpu_custom_call.1} parent=1 // pred_check_branch
      %79 = sbr.rel (0) target = $region33
    $region32: #{tpu_custom_call.1} parent=1 // pred_region
      _
    $region33: #{tpu_custom_call.1} parent=1 // pred_fallthru
      _
    // Predicated region
    $region34: #{tpu_custom_call.1} parent=1 // pred_check
      _
    $region35: #{tpu_custom_call.1} parent=1 // pred_check_branch
      %81 = sbr.rel (0) target = $region37
    $region36: #{tpu_custom_call.1} parent=1 // pred_region
      _
    $region37: #{tpu_custom_call.1} parent=1 // pred_fallthru
      _
    // Predicated region
    $region38: #{tpu_custom_call.1} parent=1 // pred_check
      _
    $region39: #{tpu_custom_call.1} parent=1 // pred_check_branch
      %83 = sbr.rel (0) target = $region41
    $region40: #{tpu_custom_call.1} parent=1 // pred_region
      %85 = vsyncadd [#allocation9], 0
      %s86 = sshll.u32 %s9, 4
      %s87 = int_to_ptr.hbm [resolvable:$true] %s86
      %s88 = sshll.u32 [#allocation10], 4
      %s89 = int_to_ptr.vmem [resolvable:$true] %s88
      %94 = dma.hbm_to_vmem [thread:$0]  %s87, 2048, %s89, [#allocation9], 128, 128, 8
    $region41: #{tpu_custom_call.1} parent=1 // pred_fallthru
      _
    // Predicated region
    $region42: #{tpu_custom_call.1} parent=1 // pred_check
      _
    $region43: #{tpu_custom_call.1} parent=1 // pred_check_branch
      %96 = sbr.rel (0) target = $region45
    $region44: #{tpu_custom_call.1} parent=1 // pred_region
      _
    $region45: #{tpu_custom_call.1} parent=1 // pred_fallthru
      _
    // Predicated region
    $region46: #{tpu_custom_call.1} parent=1 // pred_check
      _
    $region47: #{tpu_custom_call.1} parent=1 // pred_check_branch
      %98 = sbr.rel (0) target = $region49
    $region48: #{tpu_custom_call.1} parent=1 // pred_region
      %100 = dma.done [#allocation3], 1024
    $region49: #{tpu_custom_call.1} parent=1 // pred_fallthru
      _
    // Predicated region
    $region50: #{tpu_custom_call.1} parent=1 // pred_check
      _
    $region51: #{tpu_custom_call.1} parent=1 // pred_check_branch
      %102 = sbr.rel (0) target = $region53
    $region52: #{tpu_custom_call.1} parent=1 // pred_region
      %104 = dma.done [#allocation6], 1024
    $region53: #{tpu_custom_call.1} parent=1 // pred_fallthru
      _
    // Predicated region
    $region54: #{tpu_custom_call.1} parent=1 // pred_check
      _
    $region55: #{tpu_custom_call.1} parent=1 // pred_check_branch
      %106 = sbr.rel (0) target = $region57
    $region56: #{tpu_custom_call.1} parent=1 // pred_region
      %108 = dma.done [#allocation6], 2048
    $region57: #{tpu_custom_call.1} parent=1 // pred_fallthru
      _
    // Predicated region
    $region58: #{tpu_custom_call.1} parent=1 // pred_check
      _
    $region59: #{tpu_custom_call.1} parent=1 // pred_check_branch
      %110 = sbr.rel (0) target = $region61
    $region60: #{tpu_custom_call.1} parent=1 // pred_region
      %112 = dma.done [#allocation9], 2048
    $region61: #{tpu_custom_call.1} parent=1 // pred_fallthru
      _
    // Predicated region
    $region62: #{tpu_custom_call.1} parent=1 // pred_check
      _
    $region63: #{tpu_custom_call.1} parent=1 // pred_check_branch
      %114 = sbr.rel (0) target = $region65
    $region64: #{tpu_custom_call.1} parent=1 // pred_region
      %116 = dma.done [#allocation9], 2048
    $region65: #{tpu_custom_call.1} parent=1 // pred_fallthru
      _
    %v117 = vld [vmem:[#allocation2] sm:$0xff]
    %v118 = vld [vmem:[#allocation2 + $0x8] sm:$0xff]
    %v119 = vld [vmem:[#allocation2 + $0x10] sm:$0xff]
    %v120 = vld [vmem:[#allocation2 + $0x18] sm:$0xff]
    %v121 = vld [vmem:[#allocation2 + $0x20] sm:$0xff]
    %v122 = vld [vmem:[#allocation2 + $0x28] sm:$0xff]
    %v123 = vld [vmem:[#allocation2 + $0x30] sm:$0xff]
    %v124 = vld [vmem:[#allocation2 + $0x38] sm:$0xff]
    %v125 = vld [vmem:[%s2] sm:$0x1]
    %v126 = vld [vmem:[%s3] sm:$0x1]
    %127 = vadd.xlane.f32.xlu0 %v117
    %v128 = vpop.xlane.xlu0 %127
    %129 = vadd.xlane.f32.xlu0 %v118
    %v130 = vpop.xlane.xlu0 %129
    %131 = vadd.xlane.f32.xlu0 %v119
    %v132 = vpop.xlane.xlu0 %131
    %133 = vadd.xlane.f32.xlu0 %v120
    %v134 = vpop.xlane.xlu0 %133
    %135 = vadd.xlane.f32.xlu0 %v121
    %v136 = vpop.xlane.xlu0 %135
    %137 = vadd.xlane.f32.xlu0 %v122
    %v138 = vpop.xlane.xlu0 %137
    %139 = vadd.xlane.f32.xlu0 %v123
    %v140 = vpop.xlane.xlu0 %139
    %141 = vadd.xlane.f32.xlu0 %v124
    %v142 = vpop.xlane.xlu0 %141
    %v143 = vmul.f32 %v128, 0.03125
    %v144 = vmul.f32 %v130, 0.03125
    %v145 = vmul.f32 %v132, 0.03125
    %v146 = vmul.f32 %v134, 0.03125
    %v147 = vmul.f32 %v136, 0.03125
    %v148 = vmul.f32 %v138, 0.03125
    %v149 = vmul.f32 %v140, 0.03125
    %v150 = vmul.f32 %v142, 0.03125
    %v151 = vmul.f32 %v117, %v117
    %v152 = vmul.f32 %v118, %v118
    %v153 = vmul.f32 %v119, %v119
    %v154 = vmul.f32 %v120, %v120
    %v155 = vmul.f32 %v121, %v121
    %v156 = vmul.f32 %v122, %v122
    %v157 = vmul.f32 %v123, %v123
    %v158 = vmul.f32 %v124, %v124
    %159 = vadd.xlane.f32.xlu0 %v151
    %v160 = vpop.xlane.xlu0 %159
    %161 = vadd.xlane.f32.xlu0 %v152
    %v162 = vpop.xlane.xlu0 %161
    %163 = vadd.xlane.f32.xlu0 %v153
    %v164 = vpop.xlane.xlu0 %163
    %165 = vadd.xlane.f32.xlu0 %v154
    %v166 = vpop.xlane.xlu0 %165
    %167 = vadd.xlane.f32.xlu0 %v155
    %v168 = vpop.xlane.xlu0 %167
    %169 = vadd.xlane.f32.xlu0 %v156
    %v170 = vpop.xlane.xlu0 %169
    %171 = vadd.xlane.f32.xlu0 %v157
    %v172 = vpop.xlane.xlu0 %171
    %173 = vadd.xlane.f32.xlu0 %v158
    %v174 = vpop.xlane.xlu0 %173
    %v175 = vmul.f32 %v160, 0.03125
    %v176 = vmul.f32 %v162, 0.03125
    %v177 = vmul.f32 %v164, 0.03125
    %v178 = vmul.f32 %v166, 0.03125
    %v179 = vmul.f32 %v168, 0.03125
    %v180 = vmul.f32 %v170, 0.03125
    %v181 = vmul.f32 %v172, 0.03125
    %v182 = vmul.f32 %v174, 0.03125
    %v183 = vmul.f32 %v143, %v143
    %v184 = vmul.f32 %v144, %v144
    %v185 = vmul.f32 %v145, %v145
    %v186 = vmul.f32 %v146, %v146
    %v187 = vmul.f32 %v147, %v147
    %v188 = vmul.f32 %v148, %v148
    %v189 = vmul.f32 %v149, %v149
    %v190 = vmul.f32 %v150, %v150
    %v191 = vsub.f32 %v175, %v183
    %v192 = vsub.f32 %v176, %v184
    %v193 = vsub.f32 %v177, %v185
    %v194 = vsub.f32 %v178, %v186
    %v195 = vsub.f32 %v179, %v187
    %v196 = vsub.f32 %v180, %v188
    %v197 = vsub.f32 %v181, %v189
    %v198 = vsub.f32 %v182, %v190
    %v199 = vmax.f32 %v191, 0.0
    %v200 = vmax.f32 %v192, 0.0
    %v201 = vmax.f32 %v193, 0.0
    %v202 = vmax.f32 %v194, 0.0
    %v203 = vmax.f32 %v195, 0.0
    %v204 = vmax.f32 %v196, 0.0
    %v205 = vmax.f32 %v197, 0.0
    %v206 = vmax.f32 %v198, 0.0
    %v207 = vsub.f32 %v117, %v143
    %v208 = vsub.f32 %v118, %v144
    %v209 = vsub.f32 %v119, %v145
    %v210 = vsub.f32 %v120, %v146
    %v211 = vsub.f32 %v121, %v147
    %v212 = vsub.f32 %v122, %v148
    %v213 = vsub.f32 %v123, %v149
    %v214 = vsub.f32 %v124, %v150
    %v215 = vadd.f32 %v199, 1e-05
    %v216 = vadd.f32 %v200, 1e-05
    %v217 = vadd.f32 %v201, 1e-05
    %v218 = vadd.f32 %v202, 1e-05
    %v219 = vadd.f32 %v203, 1e-05
    %v220 = vadd.f32 %v204, 1e-05
    %v221 = vadd.f32 %v205, 1e-05
    %v222 = vadd.f32 %v206, 1e-05
    %v223 = vrsqrt.pop %v215
    %v224 = vmul.f32 %v223, %v215
    %v225 = vmul.f32 %v224, %v223
    %v226 = vmul.f32 0.5, %v225
    %v227 = vsub.f32 1.5, %v226
    %v228 = vmul.f32 %v223, %v227
    %vm229 = vweird.f32 %v215
    %vm230 = vweird.f32 %v223
    %vm231 = vmor %vm229, %vm230
    %v232 = vsel %vm231, %v223, %v228
    %v233 = vrsqrt.pop %v216
    %v234 = vmul.f32 %v233, %v216
    %v235 = vmul.f32 %v234, %v233
    %v236 = vmul.f32 0.5, %v235
    %v237 = vsub.f32 1.5, %v236
    %v238 = vmul.f32 %v233, %v237
    %vm239 = vweird.f32 %v216
    %vm240 = vweird.f32 %v233
    %vm241 = vmor %vm239, %vm240
    %v242 = vsel %vm241, %v233, %v238
    %v243 = vrsqrt.pop %v217
    %v244 = vmul.f32 %v243, %v217
    %v245 = vmul.f32 %v244, %v243
    %v246 = vmul.f32 0.5, %v245
    %v247 = vsub.f32 1.5, %v246
    %v248 = vmul.f32 %v243, %v247
    %vm249 = vweird.f32 %v217
    %vm250 = vweird.f32 %v243
    %vm251 = vmor %vm249, %vm250
    %v252 = vsel %vm251, %v243, %v248
    %v253 = vrsqrt.pop %v218
    %v254 = vmul.f32 %v253, %v218
    %v255 = vmul.f32 %v254, %v253
    %v256 = vmul.f32 0.5, %v255
    %v257 = vsub.f32 1.5, %v256
    %v258 = vmul.f32 %v253, %v257
    %vm259 = vweird.f32 %v218
    %vm260 = vweird.f32 %v253
    %vm261 = vmor %vm259, %vm260
    %v262 = vsel %vm261, %v253, %v258
    %v263 = vrsqrt.pop %v219
    %v264 = vmul.f32 %v263, %v219
    %v265 = vmul.f32 %v264, %v263
    %v266 = vmul.f32 0.5, %v265
    %v267 = vsub.f32 1.5, %v266
    %v268 = vmul.f32 %v263, %v267
    %vm269 = vweird.f32 %v219
    %vm270 = vweird.f32 %v263
    %vm271 = vmor %vm269, %vm270
    %v272 = vsel %vm271, %v263, %v268
    %v273 = vrsqrt.pop %v220
    %v274 = vmul.f32 %v273, %v220
    %v275 = vmul.f32 %v274, %v273
    %v276 = vmul.f32 0.5, %v275
    %v277 = vsub.f32 1.5, %v276
    %v278 = vmul.f32 %v273, %v277
    %vm279 = vweird.f32 %v220
    %vm280 = vweird.f32 %v273
    %vm281 = vmor %vm279, %vm280
    %v282 = vsel %vm281, %v273, %v278
    %v283 = vrsqrt.pop %v221
    %v284 = vmul.f32 %v283, %v221
    %v285 = vmul.f32 %v284, %v283
    %v286 = vmul.f32 0.5, %v285
    %v287 = vsub.f32 1.5, %v286
    %v288 = vmul.f32 %v283, %v287
    %vm289 = vweird.f32 %v221
    %vm290 = vweird.f32 %v283
    %vm291 = vmor %vm289, %vm290
    %v292 = vsel %vm291, %v283, %v288
    %v293 = vrsqrt.pop %v222
    %v294 = vmul.f32 %v293, %v222
    %v295 = vmul.f32 %v294, %v293
    %v296 = vmul.f32 0.5, %v295
    %v297 = vsub.f32 1.5, %v296
    %v298 = vmul.f32 %v293, %v297
    %vm299 = vweird.f32 %v222
    %vm300 = vweird.f32 %v293
    %vm301 = vmor %vm299, %vm300
    %v302 = vsel %vm301, %v293, %v298
    %v303 = vmul.f32 %v207, %v232
    %v304 = vmul.f32 %v208, %v242
    %v305 = vmul.f32 %v209, %v252
    %v306 = vmul.f32 %v210, %v262
    %v307 = vmul.f32 %v211, %v272
    %v308 = vmul.f32 %v212, %v282
    %v309 = vmul.f32 %v213, %v292
    %v310 = vmul.f32 %v214, %v302
    %v312 = vperm.slane %v125, 0
    %v314 = vmul.f32 %v303, %v312
    %v315 = vmul.f32 %v304, %v312
    %v316 = vmul.f32 %v305, %v312
    %v317 = vmul.f32 %v306, %v312
    %v318 = vmul.f32 %v307, %v312
    %v319 = vmul.f32 %v308, %v312
    %v320 = vmul.f32 %v309, %v312
    %v321 = vmul.f32 %v310, %v312
    %v323 = vperm.slane %v126, 0
    %v325 = vadd.f32 %v314, %v323
    %v326 = vadd.f32 %v315, %v323
    %v327 = vadd.f32 %v316, %v323
    %v328 = vadd.f32 %v317, %v323
    %v329 = vadd.f32 %v318, %v323
    %v330 = vadd.f32 %v319, %v323
    %v331 = vadd.f32 %v320, %v323
    %v332 = vadd.f32 %v321, %v323
    %vm333 = vcmp.ge.f32.partialorder %v325, 0.0
    %vm334 = vcmp.ge.f32.partialorder %v326, 0.0
    %vm335 = vcmp.ge.f32.partialorder %v327, 0.0
    %vm336 = vcmp.ge.f32.partialorder %v328, 0.0
    %vm337 = vcmp.ge.f32.partialorder %v329, 0.0
    %vm338 = vcmp.ge.f32.partialorder %v330, 0.0
    %vm339 = vcmp.ge.f32.partialorder %v331, 0.0
    %vm340 = vcmp.ge.f32.partialorder %v332, 0.0
    %v341 = vmul.f32 %v325, 0.02
    %v342 = vmul.f32 %v326, 0.02
    %v343 = vmul.f32 %v327, 0.02
    %v344 = vmul.f32 %v328, 0.02
    %v345 = vmul.f32 %v329, 0.02
    %v346 = vmul.f32 %v330, 0.02
    %v347 = vmul.f32 %v331, 0.02
    %v348 = vmul.f32 %v332, 0.02
    %v349 = vsel %vm333, %v325, %v341
    %v350 = vsel %vm334, %v326, %v342
    %v351 = vsel %vm335, %v327, %v343
    %v352 = vsel %vm336, %v328, %v344
    %v353 = vsel %vm337, %v329, %v345
    %v354 = vsel %vm338, %v330, %v346
    %v355 = vsel %vm339, %v331, %v347
    %v356 = vsel %vm340, %v332, %v348
    %v357 = vld [vmem:[#allocation5] sm:$0xff]
    %v358 = vld [vmem:[#allocation5 + $0x8] sm:$0xff]
    %v359 = vld [vmem:[#allocation5 + $0x10] sm:$0xff]
    %v360 = vld [vmem:[#allocation5 + $0x18] sm:$0xff]
    %v361 = vld [vmem:[#allocation5 + $0x20] sm:$0xff]
    %v362 = vld [vmem:[#allocation5 + $0x28] sm:$0xff]
    %v363 = vld [vmem:[#allocation5 + $0x30] sm:$0xff]
    %v364 = vld [vmem:[#allocation5 + $0x38] sm:$0xff]
    %vm365 = vcmp.ge.f32.partialorder %v357, 0.0
    %vm366 = vcmp.ge.f32.partialorder %v358, 0.0
    %vm367 = vcmp.ge.f32.partialorder %v359, 0.0
    %vm368 = vcmp.ge.f32.partialorder %v360, 0.0
    %vm369 = vcmp.ge.f32.partialorder %v361, 0.0
    %vm370 = vcmp.ge.f32.partialorder %v362, 0.0
    %vm371 = vcmp.ge.f32.partialorder %v363, 0.0
    %vm372 = vcmp.ge.f32.partialorder %v364, 0.0
    %v373 = vmul.f32 %v357, 0.02
    %v374 = vmul.f32 %v358, 0.02
    %v375 = vmul.f32 %v359, 0.02
    %v376 = vmul.f32 %v360, 0.02
    %v377 = vmul.f32 %v361, 0.02
    %v378 = vmul.f32 %v362, 0.02
    %v379 = vmul.f32 %v363, 0.02
    %v380 = vmul.f32 %v364, 0.02
    %v381 = vsel %vm365, %v357, %v373
    %v382 = vsel %vm366, %v358, %v374
    %v383 = vsel %vm367, %v359, %v375
    %v384 = vsel %vm368, %v360, %v376
    %v385 = vsel %vm369, %v361, %v377
    %v386 = vsel %vm370, %v362, %v378
    %v387 = vsel %vm371, %v363, %v379
    %v388 = vsel %vm372, %v364, %v380
    %v389 = vld [vmem:[#allocation7] sm:$0xff]
    %v390 = vld [vmem:[#allocation7 + $0x8] sm:$0xff]
    %v391 = vld [vmem:[#allocation7 + $0x10] sm:$0xff]
    %v392 = vld [vmem:[#allocation7 + $0x18] sm:$0xff]
    %v393 = vld [vmem:[#allocation7 + $0x20] sm:$0xff]
    %v394 = vld [vmem:[#allocation7 + $0x28] sm:$0xff]
    %v395 = vld [vmem:[#allocation7 + $0x30] sm:$0xff]
    %v396 = vld [vmem:[#allocation7 + $0x38] sm:$0xff]
    %v397 = vld [vmem:[#allocation7 + $0x40] sm:$0xff]
    %v398 = vld [vmem:[#allocation7 + $0x48] sm:$0xff]
    %v399 = vld [vmem:[#allocation7 + $0x50] sm:$0xff]
    %v400 = vld [vmem:[#allocation7 + $0x58] sm:$0xff]
    %v401 = vld [vmem:[#allocation7 + $0x60] sm:$0xff]
    %v402 = vld [vmem:[#allocation7 + $0x68] sm:$0xff]
    %v403 = vld [vmem:[#allocation7 + $0x70] sm:$0xff]
    %v404 = vld [vmem:[#allocation7 + $0x78] sm:$0xff]
    %v405 = vld [vmem:[#allocation8] sm:$0xff]
    %v406 = vld [vmem:[#allocation8 + $0x8] sm:$0xff]
    %v407 = vld [vmem:[#allocation8 + $0x10] sm:$0xff]
    %v408 = vld [vmem:[#allocation8 + $0x18] sm:$0xff]
    %v409 = vld [vmem:[#allocation8 + $0x20] sm:$0xff]
    %v410 = vld [vmem:[#allocation8 + $0x28] sm:$0xff]
    %v411 = vld [vmem:[#allocation8 + $0x30] sm:$0xff]
    %v412 = vld [vmem:[#allocation8 + $0x38] sm:$0xff]
    %v413 = vld [vmem:[#allocation8 + $0x40] sm:$0xff]
    %v414 = vld [vmem:[#allocation8 + $0x48] sm:$0xff]
    %v415 = vld [vmem:[#allocation8 + $0x50] sm:$0xff]
    %v416 = vld [vmem:[#allocation8 + $0x58] sm:$0xff]
    %v417 = vld [vmem:[#allocation8 + $0x60] sm:$0xff]
    %v418 = vld [vmem:[#allocation8 + $0x68] sm:$0xff]
    %v419 = vld [vmem:[#allocation8 + $0x70] sm:$0xff]
    %v420 = vld [vmem:[#allocation8 + $0x78] sm:$0xff]
    %421 = vmatpush.msra.mxu0 %v420
    %422 = vmatpush.msra.mxu0 %v419
    %423 = vmatpush.msra.mxu0 %v418
    %424 = vmatpush.msra.mxu0 %v417
    %425 = vmatpush.msra.mxu0 %v416
    %426 = vmatpush.msra.mxu0 %v415
    %427 = vmatpush.msra.mxu0 %v414
    %428 = vmatpush.msra.mxu0 %v413
    %429 = vmatpush.msra.mxu0 %v412
    %430 = vmatpush.msra.mxu0 %v411
    %431 = vmatpush.msra.mxu0 %v410
    %432 = vmatpush.msra.mxu0 %v409
    %433 = vmatpush.msra.mxu0 %v408
    %434 = vmatpush.msra.mxu0 %v407
    %435 = vmatpush.msra.mxu0 %v406
    %436 = vmatpush.msra.mxu0 %v405
    %437 = vmatmul.f32.gmra.mxu0 %v381
    %v438 = vpop.f32.mrf.mxu0
    %v439 = vadd.f32 0.0, %v438
    %440 = vmatmul.f32.gmra.mxu0 %v382
    %v441 = vpop.f32.mrf.mxu0
    %v442 = vadd.f32 0.0, %v441
    %443 = vmatmul.f32.gmra.mxu0 %v383
    %v444 = vpop.f32.mrf.mxu0
    %v445 = vadd.f32 0.0, %v444
    %446 = vmatmul.f32.gmra.mxu0 %v384
    %v447 = vpop.f32.mrf.mxu0
    %v448 = vadd.f32 0.0, %v447
    %449 = vmatmul.f32.gmra.mxu0 %v385
    %v450 = vpop.f32.mrf.mxu0
    %v451 = vadd.f32 0.0, %v450
    %452 = vmatmul.f32.gmra.mxu0 %v386
    %v453 = vpop.f32.mrf.mxu0
    %v454 = vadd.f32 0.0, %v453
    %455 = vmatmul.f32.gmra.mxu0 %v387
    %v456 = vpop.f32.mrf.mxu0
    %v457 = vadd.f32 0.0, %v456
    %458 = vmatmul.f32.gmra.mxu0 %v388
    %v459 = vpop.f32.mrf.mxu0
    %v460 = vadd.f32 0.0, %v459
    %461 = vdwg.mxu0
    %462 = vmatpush.msra.mxu0 %v404
    %463 = vmatpush.msra.mxu0 %v403
    %464 = vmatpush.msra.mxu0 %v402
    %465 = vmatpush.msra.mxu0 %v401
    %466 = vmatpush.msra.mxu0 %v400
    %467 = vmatpush.msra.mxu0 %v399
    %468 = vmatpush.msra.mxu0 %v398
    %469 = vmatpush.msra.mxu0 %v397
    %470 = vmatpush.msra.mxu0 %v396
    %471 = vmatpush.msra.mxu0 %v395
    %472 = vmatpush.msra.mxu0 %v394
    %473 = vmatpush.msra.mxu0 %v393
    %474 = vmatpush.msra.mxu0 %v392
    %475 = vmatpush.msra.mxu0 %v391
    %476 = vmatpush.msra.mxu0 %v390
    %477 = vmatpush.msra.mxu0 %v389
    %478 = vmatmul.f32.gmra.mxu0 %v349
    %v479 = vpop.f32.mrf.mxu0
    %v480 = vadd.f32 %v439, %v479
    %481 = vmatmul.f32.gmra.mxu0 %v350
    %v482 = vpop.f32.mrf.mxu0
    %v483 = vadd.f32 %v442, %v482
    %484 = vmatmul.f32.gmra.mxu0 %v351
    %v485 = vpop.f32.mrf.mxu0
    %v486 = vadd.f32 %v445, %v485
    %487 = vmatmul.f32.gmra.mxu0 %v352
    %v488 = vpop.f32.mrf.mxu0
    %v489 = vadd.f32 %v448, %v488
    %490 = vmatmul.f32.gmra.mxu0 %v353
    %v491 = vpop.f32.mrf.mxu0
    %v492 = vadd.f32 %v451, %v491
    %493 = vmatmul.f32.gmra.mxu0 %v354
    %v494 = vpop.f32.mrf.mxu0
    %v495 = vadd.f32 %v454, %v494
    %496 = vmatmul.f32.gmra.mxu0 %v355
    %v497 = vpop.f32.mrf.mxu0
    %v498 = vadd.f32 %v457, %v497
    %499 = vmatmul.f32.gmra.mxu0 %v356
    %v500 = vpop.f32.mrf.mxu0
    %v501 = vadd.f32 %v460, %v500
    %502 = vdwg.mxu0
    %v503 = vld [vmem:[%s6] sm:$0x1]
    %v505 = vperm.slane %v503, 0
    %v507 = vadd.f32 %v480, %v505
    %v508 = vadd.f32 %v483, %v505
    %v509 = vadd.f32 %v486, %v505
    %v510 = vadd.f32 %v489, %v505
    %v511 = vadd.f32 %v492, %v505
    %v512 = vadd.f32 %v495, %v505
    %v513 = vadd.f32 %v498, %v505
    %v514 = vadd.f32 %v501, %v505
    %v515 = vld [vmem:[%s7] sm:$0x1]
    %v516 = vld [vmem:[%s8] sm:$0x1]
    %517 = vadd.xlane.f32.xlu0 %v507
    %v518 = vpop.xlane.xlu0 %517
    %519 = vadd.xlane.f32.xlu0 %v508
    %v520 = vpop.xlane.xlu0 %519
    %521 = vadd.xlane.f32.xlu0 %v509
    %v522 = vpop.xlane.xlu0 %521
    %523 = vadd.xlane.f32.xlu0 %v510
    %v524 = vpop.xlane.xlu0 %523
    %525 = vadd.xlane.f32.xlu0 %v511
    %v526 = vpop.xlane.xlu0 %525
    %527 = vadd.xlane.f32.xlu0 %v512
    %v528 = vpop.xlane.xlu0 %527
    %529 = vadd.xlane.f32.xlu0 %v513
    %v530 = vpop.xlane.xlu0 %529
    %531 = vadd.xlane.f32.xlu0 %v514
    %v532 = vpop.xlane.xlu0 %531
    %v533 = vmul.f32 %v518, 0.020833334
    %v534 = vmul.f32 %v520, 0.020833334
    %v535 = vmul.f32 %v522, 0.020833334
    %v536 = vmul.f32 %v524, 0.020833334
    %v537 = vmul.f32 %v526, 0.020833334
    %v538 = vmul.f32 %v528, 0.020833334
    %v539 = vmul.f32 %v530, 0.020833334
    %v540 = vmul.f32 %v532, 0.020833334
    %v541 = vmul.f32 %v507, %v507
    %v542 = vmul.f32 %v508, %v508
    %v543 = vmul.f32 %v509, %v509
    %v544 = vmul.f32 %v510, %v510
    %v545 = vmul.f32 %v511, %v511
    %v546 = vmul.f32 %v512, %v512
    %v547 = vmul.f32 %v513, %v513
    %v548 = vmul.f32 %v514, %v514
    %549 = vadd.xlane.f32.xlu0 %v541
    %v550 = vpop.xlane.xlu0 %549
    %551 = vadd.xlane.f32.xlu0 %v542
    %v552 = vpop.xlane.xlu0 %551
    %553 = vadd.xlane.f32.xlu0 %v543
    %v554 = vpop.xlane.xlu0 %553
    %555 = vadd.xlane.f32.xlu0 %v544
    %v556 = vpop.xlane.xlu0 %555
    %557 = vadd.xlane.f32.xlu0 %v545
    %v558 = vpop.xlane.xlu0 %557
    %559 = vadd.xlane.f32.xlu0 %v546
    %v560 = vpop.xlane.xlu0 %559
    %561 = vadd.xlane.f32.xlu0 %v547
    %v562 = vpop.xlane.xlu0 %561
    %563 = vadd.xlane.f32.xlu0 %v548
    %v564 = vpop.xlane.xlu0 %563
    %v565 = vmul.f32 %v550, 0.020833334
    %v566 = vmul.f32 %v552, 0.020833334
    %v567 = vmul.f32 %v554, 0.020833334
    %v568 = vmul.f32 %v556, 0.020833334
    %v569 = vmul.f32 %v558, 0.020833334
    %v570 = vmul.f32 %v560, 0.020833334
    %v571 = vmul.f32 %v562, 0.020833334
    %v572 = vmul.f32 %v564, 0.020833334
    %v573 = vmul.f32 %v533, %v533
    %v574 = vmul.f32 %v534, %v534
    %v575 = vmul.f32 %v535, %v535
    %v576 = vmul.f32 %v536, %v536
    %v577 = vmul.f32 %v537, %v537
    %v578 = vmul.f32 %v538, %v538
    %v579 = vmul.f32 %v539, %v539
    %v580 = vmul.f32 %v540, %v540
    %v581 = vsub.f32 %v565, %v573
    %v582 = vsub.f32 %v566, %v574
    %v583 = vsub.f32 %v567, %v575
    %v584 = vsub.f32 %v568, %v576
    %v585 = vsub.f32 %v569, %v577
    %v586 = vsub.f32 %v570, %v578
    %v587 = vsub.f32 %v571, %v579
    %v588 = vsub.f32 %v572, %v580
    %v589 = vmax.f32 %v581, 0.0
    %v590 = vmax.f32 %v582, 0.0
    %v591 = vmax.f32 %v583, 0.0
    %v592 = vmax.f32 %v584, 0.0
    %v593 = vmax.f32 %v585, 0.0
    %v594 = vmax.f32 %v586, 0.0
    %v595 = vmax.f32 %v587, 0.0
    %v596 = vmax.f32 %v588, 0.0
    %v597 = vsub.f32 %v507, %v533
    %v598 = vsub.f32 %v508, %v534
    %v599 = vsub.f32 %v509, %v535
    %v600 = vsub.f32 %v510, %v536
    %v601 = vsub.f32 %v511, %v537
    %v602 = vsub.f32 %v512, %v538
    %v603 = vsub.f32 %v513, %v539
    %v604 = vsub.f32 %v514, %v540
    %v605 = vadd.f32 %v589, 1e-05
    %v606 = vadd.f32 %v590, 1e-05
    %v607 = vadd.f32 %v591, 1e-05
    %v608 = vadd.f32 %v592, 1e-05
    %v609 = vadd.f32 %v593, 1e-05
    %v610 = vadd.f32 %v594, 1e-05
    %v611 = vadd.f32 %v595, 1e-05
    %v612 = vadd.f32 %v596, 1e-05
    %v613 = vrsqrt.pop %v605
    %v614 = vmul.f32 %v613, %v605
    %v615 = vmul.f32 %v614, %v613
    %v616 = vmul.f32 0.5, %v615
    %v617 = vsub.f32 1.5, %v616
    %v618 = vmul.f32 %v613, %v617
    %vm619 = vweird.f32 %v605
    %vm620 = vweird.f32 %v613
    %vm621 = vmor %vm619, %vm620
    %v622 = vsel %vm621, %v613, %v618
    %v623 = vrsqrt.pop %v606
    %v624 = vmul.f32 %v623, %v606
    %v625 = vmul.f32 %v624, %v623
    %v626 = vmul.f32 0.5, %v625
    %v627 = vsub.f32 1.5, %v626
    %v628 = vmul.f32 %v623, %v627
    %vm629 = vweird.f32 %v606
    %vm630 = vweird.f32 %v623
    %vm631 = vmor %vm629, %vm630
    %v632 = vsel %vm631, %v623, %v628
    %v633 = vrsqrt.pop %v607
    %v634 = vmul.f32 %v633, %v607
    %v635 = vmul.f32 %v634, %v633
    %v636 = vmul.f32 0.5, %v635
    %v637 = vsub.f32 1.5, %v636
    %v638 = vmul.f32 %v633, %v637
    %vm639 = vweird.f32 %v607
    %vm640 = vweird.f32 %v633
    %vm641 = vmor %vm639, %vm640
    %v642 = vsel %vm641, %v633, %v638
    %v643 = vrsqrt.pop %v608
    %v644 = vmul.f32 %v643, %v608
    %v645 = vmul.f32 %v644, %v643
    %v646 = vmul.f32 0.5, %v645
    %v647 = vsub.f32 1.5, %v646
    %v648 = vmul.f32 %v643, %v647
    %vm649 = vweird.f32 %v608
    %vm650 = vweird.f32 %v643
    %vm651 = vmor %vm649, %vm650
    %v652 = vsel %vm651, %v643, %v648
    %v653 = vrsqrt.pop %v609
    %v654 = vmul.f32 %v653, %v609
    %v655 = vmul.f32 %v654, %v653
    %v656 = vmul.f32 0.5, %v655
    %v657 = vsub.f32 1.5, %v656
    %v658 = vmul.f32 %v653, %v657
    %vm659 = vweird.f32 %v609
    %vm660 = vweird.f32 %v653
    %vm661 = vmor %vm659, %vm660
    %v662 = vsel %vm661, %v653, %v658
    %v663 = vrsqrt.pop %v610
    %v664 = vmul.f32 %v663, %v610
    %v665 = vmul.f32 %v664, %v663
    %v666 = vmul.f32 0.5, %v665
    %v667 = vsub.f32 1.5, %v666
    %v668 = vmul.f32 %v663, %v667
    %vm669 = vweird.f32 %v610
    %vm670 = vweird.f32 %v663
    %vm671 = vmor %vm669, %vm670
    %v672 = vsel %vm671, %v663, %v668
    %v673 = vrsqrt.pop %v611
    %v674 = vmul.f32 %v673, %v611
    %v675 = vmul.f32 %v674, %v673
    %v676 = vmul.f32 0.5, %v675
    %v677 = vsub.f32 1.5, %v676
    %v678 = vmul.f32 %v673, %v677
    %vm679 = vweird.f32 %v611
    %vm680 = vweird.f32 %v673
    %vm681 = vmor %vm679, %vm680
    %v682 = vsel %vm681, %v673, %v678
    %v683 = vrsqrt.pop %v612
    %v684 = vmul.f32 %v683, %v612
    %v685 = vmul.f32 %v684, %v683
    %v686 = vmul.f32 0.5, %v685
    %v687 = vsub.f32 1.5, %v686
    %v688 = vmul.f32 %v683, %v687
    %vm689 = vweird.f32 %v612
    %vm690 = vweird.f32 %v683
    %vm691 = vmor %vm689, %vm690
    %v692 = vsel %vm691, %v683, %v688
    %v693 = vmul.f32 %v597, %v622
    %v694 = vmul.f32 %v598, %v632
    %v695 = vmul.f32 %v599, %v642
    %v696 = vmul.f32 %v600, %v652
    %v697 = vmul.f32 %v601, %v662
    %v698 = vmul.f32 %v602, %v672
    %v699 = vmul.f32 %v603, %v682
    %v700 = vmul.f32 %v604, %v692
    %v702 = vperm.slane %v515, 0
    %v704 = vmul.f32 %v693, %v702
    %v705 = vmul.f32 %v694, %v702
    %v706 = vmul.f32 %v695, %v702
    %v707 = vmul.f32 %v696, %v702
    %v708 = vmul.f32 %v697, %v702
    %v709 = vmul.f32 %v698, %v702
    %v710 = vmul.f32 %v699, %v702
    %v711 = vmul.f32 %v700, %v702
    %v713 = vperm.slane %v516, 0
    %v715 = vadd.f32 %v704, %v713
    %v716 = vadd.f32 %v705, %v713
    %v717 = vadd.f32 %v706, %v713
    %v718 = vadd.f32 %v707, %v713
    %v719 = vadd.f32 %v708, %v713
    %v720 = vadd.f32 %v709, %v713
    %v721 = vadd.f32 %v710, %v713
    %v722 = vadd.f32 %v711, %v713
    %vm723 = vcmp.ge.f32.partialorder %v715, 0.0
    %vm724 = vcmp.ge.f32.partialorder %v716, 0.0
    %vm725 = vcmp.ge.f32.partialorder %v717, 0.0
    %vm726 = vcmp.ge.f32.partialorder %v718, 0.0
    %vm727 = vcmp.ge.f32.partialorder %v719, 0.0
    %vm728 = vcmp.ge.f32.partialorder %v720, 0.0
    %vm729 = vcmp.ge.f32.partialorder %v721, 0.0
    %vm730 = vcmp.ge.f32.partialorder %v722, 0.0
    %v731 = vmul.f32 %v715, 0.02
    %v732 = vmul.f32 %v716, 0.02
    %v733 = vmul.f32 %v717, 0.02
    %v734 = vmul.f32 %v718, 0.02
    %v735 = vmul.f32 %v719, 0.02
    %v736 = vmul.f32 %v720, 0.02
    %v737 = vmul.f32 %v721, 0.02
    %v738 = vmul.f32 %v722, 0.02
    %v739 = vsel %vm723, %v715, %v731
    %v740 = vsel %vm724, %v716, %v732
    %v741 = vsel %vm725, %v717, %v733
    %v742 = vsel %vm726, %v718, %v734
    %v743 = vsel %vm727, %v719, %v735
    %v744 = vsel %vm728, %v720, %v736
    %v745 = vsel %vm729, %v721, %v737
    %v746 = vsel %vm730, %v722, %v738
    %v747 = vld [vmem:[#allocation10] sm:$0xff]
    %v748 = vld [vmem:[#allocation10 + $0x8] sm:$0xff]
    %v749 = vld [vmem:[#allocation10 + $0x10] sm:$0xff]
    %v750 = vld [vmem:[#allocation10 + $0x18] sm:$0xff]
    %v751 = vld [vmem:[#allocation10 + $0x20] sm:$0xff]
    %v752 = vld [vmem:[#allocation10 + $0x28] sm:$0xff]
    %v753 = vld [vmem:[#allocation10 + $0x30] sm:$0xff]
    %v754 = vld [vmem:[#allocation10 + $0x38] sm:$0xff]
    %v755 = vld [vmem:[#allocation10 + $0x40] sm:$0xff]
    %v756 = vld [vmem:[#allocation10 + $0x48] sm:$0xff]
    %v757 = vld [vmem:[#allocation10 + $0x50] sm:$0xff]
    %v758 = vld [vmem:[#allocation10 + $0x58] sm:$0xff]
    %v759 = vld [vmem:[#allocation10 + $0x60] sm:$0xff]
    %v760 = vld [vmem:[#allocation10 + $0x68] sm:$0xff]
    %v761 = vld [vmem:[#allocation10 + $0x70] sm:$0xff]
    %v762 = vld [vmem:[#allocation10 + $0x78] sm:$0xff]
    %v763 = vld [vmem:[%s10] sm:$0x1]
    %v765 = vperm.slane %v763, 0
    %767 = vmatpush.msra.mxu0 %v762
    %768 = vmatpush.msra.mxu0 %v761
    %769 = vmatpush.msra.mxu0 %v760
    %770 = vmatpush.msra.mxu0 %v759
    %771 = vmatpush.msra.mxu0 %v758
    %772 = vmatpush.msra.mxu0 %v757
    %773 = vmatpush.msra.mxu0 %v756
    %774 = vmatpush.msra.mxu0 %v755
    %775 = vmatpush.msra.mxu0 %v754
    %776 = vmatpush.msra.mxu0 %v753
    %777 = vmatpush.msra.mxu0 %v752
    %778 = vmatpush.msra.mxu0 %v751
    %779 = vmatpush.msra.mxu0 %v750
    %780 = vmatpush.msra.mxu0 %v749
    %781 = vmatpush.msra.mxu0 %v748
    %782 = vmatpush.msra.mxu0 %v747
    %783 = vmatmul.f32.gmra.mxu0 %v739
    %v784 = vpop.f32.mrf.mxu0
    %v785 = vadd.f32 %v765, %v784
    %786 = vmatmul.f32.gmra.mxu0 %v740
    %v787 = vpop.f32.mrf.mxu0
    %v788 = vadd.f32 %v765, %v787
    %789 = vmatmul.f32.gmra.mxu0 %v741
    %v790 = vpop.f32.mrf.mxu0
    %v791 = vadd.f32 %v765, %v790
    %792 = vmatmul.f32.gmra.mxu0 %v742
    %v793 = vpop.f32.mrf.mxu0
    %v794 = vadd.f32 %v765, %v793
    %795 = vmatmul.f32.gmra.mxu0 %v743
    %v796 = vpop.f32.mrf.mxu0
    %v797 = vadd.f32 %v765, %v796
    %798 = vmatmul.f32.gmra.mxu0 %v744
    %v799 = vpop.f32.mrf.mxu0
    %v800 = vadd.f32 %v765, %v799
    %801 = vmatmul.f32.gmra.mxu0 %v745
    %v802 = vpop.f32.mrf.mxu0
    %v803 = vadd.f32 %v765, %v802
    %804 = vmatmul.f32.gmra.mxu0 %v746
    %v805 = vpop.f32.mrf.mxu0
    %v806 = vadd.f32 %v765, %v805
    %807 = vdwg.mxu0
    %808 = vst [vmem:[#allocation11] sm:$0xff] %v785
    %809 = vst [vmem:[#allocation11 + $0x8] sm:$0xff] %v788
    %810 = vst [vmem:[#allocation11 + $0x10] sm:$0xff] %v791
    %811 = vst [vmem:[#allocation11 + $0x18] sm:$0xff] %v794
    %812 = vst [vmem:[#allocation11 + $0x20] sm:$0xff] %v797
    %813 = vst [vmem:[#allocation11 + $0x28] sm:$0xff] %v800
    %814 = vst [vmem:[#allocation11 + $0x30] sm:$0xff] %v803
    %815 = vst [vmem:[#allocation11 + $0x38] sm:$0xff] %v806
    // Predicated region
    $region66: #{tpu_custom_call.1} parent=1 // pred_check
      _
    $region67: #{tpu_custom_call.1} parent=1 // pred_check_branch
      %817 = sbr.rel (0) target = $region69
    $region68: #{tpu_custom_call.1} parent=1 // pred_region
      %819 = vsyncadd [#allocation4], 0
      %s820 = sshll.u32 [#allocation11], 4
      %s821 = int_to_ptr.vmem [resolvable:$true] %s820
      %s822 = sshll.u32 %s11, 4
      %s823 = int_to_ptr.hbm [resolvable:$true] %s822
      %828 = dma.vmem_to_hbm [thread:$0]  %s821, 1024, %s823, [#allocation4], 128, 128, 8
    $region69: #{tpu_custom_call.1} parent=1 // pred_fallthru
      _
    // Predicated region
    $region70: #{tpu_custom_call.1} parent=1 // pred_check
      _
    $region71: #{tpu_custom_call.1} parent=1 // pred_check_branch
      %830 = sbr.rel (0) target = $region73
    $region72: #{tpu_custom_call.1} parent=1 // pred_region
      %832 = dma.done [#allocation4], 1024
    $region73: #{tpu_custom_call.1} parent=1 // pred_fallthru
      _
    %833 = vsyncpa [#allocation3], 1
    %834 = vsyncpa [#allocation6], 1
    %835 = vsyncpa [#allocation9], 1
    %836 = vsyncpa [#allocation4], 1

</llo_original>
